<compile_context>
chip_gen: v6e
topology: v6e:2x2x1
jax: 0.10.0
libtpu: 0.0.40
codegen_flags: <defaults>
</compile_context>

<pallas_src>
import functools

import jax
import jax.numpy as jnp
from jax.experimental import pallas as pl
from jax.experimental.pallas import tpu as pltpu


def _round_up(v, m):
    return ((v + m - 1) // m) * m


def _pad_to(a, shape):
    return jnp.pad(a, [(0, s - d) for d, s in zip(a.shape, shape)])


def _auto_tile(n):
    # Largest power-of-two tile in [128, 512] that still leaves >= 2 tiles
    # (keeps both v7x TensorCores busy on the parallel query axis and bounds
    # padding waste on small graphs).
    for t in (512, 256, 128):
        if n >= 2 * t:
            return t
    return 128


def preprocess_adjacency(adj):
    """One-off O(N^2) predicate cast; reuse the result across heads/layers."""
    if adj.dtype == jnp.int8:
        return adj
    if adj.dtype == jnp.bool_:
        return adj.astype(jnp.int8)
    return (adj > 0).astype(jnp.int8)


# ---------------------------------------------------------------------------
# Kernel A: Wh = x @ W (MXU, f32 accum, stored bf16) + attention projections.
# ---------------------------------------------------------------------------
def _project_kernel(x_ref, w_ref, a1_ref, a2_ref, wh_ref, wh1_ref, wh2_ref):
    wh = jnp.dot(x_ref[...], w_ref[...], preferred_element_type=jnp.float32)
    wh_ref[...] = wh.astype(wh_ref.dtype)                       # bf16 copy for kernel B
    # Attention projections as VPU multiply + XLU row-reduction (f32, from f32 Wh).
    wh1_ref[...] = jnp.sum(wh * a1_ref[...], axis=-1, keepdims=True)
    wh2_ref[...] = jnp.sum(wh * a2_ref[...], axis=-1, keepdims=True)


# ---------------------------------------------------------------------------
# Kernel B: flash-style masked softmax + attention @ Wh + ELU.
# ---------------------------------------------------------------------------
def _attention_kernel(wh1_ref, wh2t_ref, adj_ref, whk_ref, out_ref,
                      m_sc, l_sc, *, alpha, resident_wh):
    k = pl.program_id(1)

    @pl.when(k == 0)
    def _init():
        m_sc[...] = jnp.full_like(m_sc[...], -jnp.inf)
        l_sc[...] = jnp.zeros_like(l_sc[...])
        out_ref[...] = jnp.zeros_like(out_ref[...])              # acc lives in out block

    # e = LeakyReLU(Wh1 + Wh2^T) on this (TQ, TK) tile, then adjacency mask (f32).
    e = wh1_ref[...] + wh2t_ref[...]                             # (TQ,1)+(1,TK) -> (TQ,TK)
    e = jnp.where(e > 0, e, alpha * e)                           # LeakyReLU(alpha)
    e = jnp.where(adj_ref[...] > 0, e, -1.0e12)                  # same mask value as PyTorch

    # Online (flash-style) softmax update.
    m_prev = m_sc[...]
    m_new = jnp.maximum(m_prev, jnp.max(e, axis=-1, keepdims=True))
    corr = jnp.exp(m_prev - m_new)                               # exp(-inf - finite) == 0 at k==0
    p = jnp.exp(e - m_new)                                       # (TQ, TK) f32
    l_sc[...] = corr * l_sc[...] + jnp.sum(p, axis=-1, keepdims=True)

    # Key-tile slice of Wh: resident (whole Wh in VMEM, dynamic leading index) or
    # streamed (one (TK, F) block DMA'd per step).
    whk = whk_ref[k] if resident_wh else whk_ref[0]              # (TK, F_out_p) bf16
    out_ref[...] = corr * out_ref[...] + jnp.dot(
        p.astype(whk.dtype), whk, preferred_element_type=jnp.float32)
    m_sc[...] = m_new

    # TODO(synk): training-mode F.dropout on the attention matrix (pltpu.prng_* mask
    # on p) is not implemented; inference-mode dropout is the identity.

    @pl.when(k == pl.num_programs(1) - 1)
    def _finalize():
        # One EUP reciprocal per query row + broadcast multiply instead of a divide.
        inv = pl.reciprocal(l_sc[...], approx=True)
        h = out_ref[...] * inv
        out_ref[...] = jnp.where(h > 0, h, jnp.exp(h) - 1.0)     # ELU (alpha = 1.0)


def node_attention_layer(x, adj, weight, attention_coef, *, alpha,
                         tile_q=None, tile_k=None):
    """Pallas implementation of NodeAttentionLayer.forward (inference mode)."""
    n, f_in = x.shape
    f_out = weight.shape[1]

    if tile_q is None:
        tile_q = _auto_tile(n)
    if tile_k is None:
        tile_k = _auto_tile(n)

    f_in_p = _round_up(f_in, 128)
    f_out_p = _round_up(f_out, 128)
    # Independent query/key padding (no lcm blow-up for asymmetric tiles).
    n_pad_q = _round_up(n, tile_q)
    n_pad_k = _round_up(n, tile_k)
    n_pad_a = max(n_pad_q, n_pad_k)                   # rows produced by the projection
    tile_a = min(tile_q, tile_k)
    if n_pad_a % tile_a:                              # only with unusual user tiles
        n_pad_a = _round_up(n_pad_a, tile_a)

    # Lane-dense, zero-padded operands for the projection.
    x_p = _pad_to(x.astype(jnp.float32), (n_pad_a, f_in_p))
    w_p = _pad_to(weight.astype(jnp.float32), (f_in_p, f_out_p))
    a1_row = _pad_to(attention_coef[:f_out].reshape(1, f_out).astype(jnp.float32),
                     (1, f_out_p))
    a2_row = _pad_to(attention_coef[f_out:].reshape(1, f_out).astype(jnp.float32),
                     (1, f_out_p))

    # ---- Kernel A: projection (Wh stored bf16; Wh1/Wh2 stay f32) ----
    na = n_pad_a // tile_a
    wh, wh1, wh2 = pl.pallas_call(
        _project_kernel,
        out_shape=(
            jax.ShapeDtypeStruct((n_pad_a, f_out_p), jnp.bfloat16),
            jax.ShapeDtypeStruct((n_pad_a, 1), jnp.float32),
            jax.ShapeDtypeStruct((n_pad_a, 1), jnp.float32),
        ),
        grid=(na,),
        in_specs=[
            pl.BlockSpec((tile_a, f_in_p), lambda r: (r, 0)),
            pl.BlockSpec((f_in_p, f_out_p), lambda r: (0, 0)),
            pl.BlockSpec((1, f_out_p), lambda r: (0, 0)),
            pl.BlockSpec((1, f_out_p), lambda r: (0, 0)),
        ],
        out_specs=(
            pl.BlockSpec((tile_a, f_out_p), lambda r: (r, 0)),
            pl.BlockSpec((tile_a, 1), lambda r: (r, 0)),
            pl.BlockSpec((tile_a, 1), lambda r: (r, 0)),
        ),
        compiler_params=pltpu.CompilerParams(dimension_semantics=("parallel",)),
    )(x_p, w_p, a1_row, a2_row)

    nq = n_pad_q // tile_q
    nk = n_pad_k // tile_k

    # Tiny relayouts outside the kernel (N*4 bytes each).
    wh1_q = wh1[:n_pad_q]
    wh2t = wh2[:n_pad_k].reshape(1, n_pad_k)
    # Key-major view of Wh for kernel B; contiguous -> free reshape.
    wh_kv = wh[:n_pad_k].reshape(nk, tile_k, f_out_p)

    # Adjacency: int8 predicate (hoistable via preprocess_adjacency) + zero pad.
    adj_p = _pad_to(preprocess_adjacency(adj), (n_pad_q, n_pad_k))

    # Keep the full Wh resident in VMEM unless the graph is huge.
    resident_wh = (2 * n_pad_k * f_out_p * 2) <= (20 << 20)
    if resident_wh:
        whk_spec = pl.BlockSpec((nk, tile_k, f_out_p), lambda i, k: (0, 0, 0))
        wh_hbm_bytes = n_pad_k * f_out_p * 2                       # read once
        whk_vmem = 2 * n_pad_k * f_out_p * 2
    else:
        whk_spec = pl.BlockSpec((1, tile_k, f_out_p), lambda i, k: (k, 0, 0))
        wh_hbm_bytes = nq * n_pad_k * f_out_p * 2                  # re-streamed per row tile
        whk_vmem = 2 * tile_k * f_out_p * 2

    # Explicit VMEM budget (v5e default scoped limit is only 16 MiB).
    vmem_est = (2 * tile_q * tile_k            # adjacency tile (int8), double-buffered
                + 2 * tile_q * f_out_p * 4     # resident output / accumulator block
                + whk_vmem                     # Wh (resident or streamed)
                + 4 * (tile_q + tile_k) * 4    # wh1 / wh2t blocks + m/l scratch
                + (2 << 20))                   # headroom
    vmem_limit = int(min(max(vmem_est, 32 << 20), 60 << 20))

    cost_b = pl.CostEstimate(
        flops=int(n_pad_q * n_pad_k * (2 * f_out_p + 8)),
        transcendentals=int(n_pad_q * n_pad_k + n_pad_q * f_out_p),
        bytes_accessed=int(n_pad_q * n_pad_k                       # int8 adjacency
                           + wh_hbm_bytes                          # bf16 Wh
                           + n_pad_q * f_out_p * 4                 # output
                           + 2 * (n_pad_q + n_pad_k) * 4),         # Wh1 / Wh2^T
    )

    kernel = functools.partial(_attention_kernel, alpha=float(alpha),
                               resident_wh=resident_wh)
    out_p = pl.pallas_call(
        kernel,
        out_shape=jax.ShapeDtypeStruct((n_pad_q, f_out_p), jnp.float32),
        grid=(nq, nk),
        in_specs=[
            pl.BlockSpec((tile_q, 1), lambda i, k: (i, 0)),        # Wh1  (query rows)
            pl.BlockSpec((1, tile_k), lambda i, k: (0, k)),        # Wh2^T (key cols, lane-dense)
            pl.BlockSpec((tile_q, tile_k), lambda i, k: (i, k)),   # adjacency tile (int8)
            whk_spec,                                              # Wh (resident or streamed)
        ],
        out_specs=pl.BlockSpec((tile_q, f_out_p), lambda i, k: (i, 0)),
        scratch_shapes=[
            pltpu.VMEM((tile_q, 1), jnp.float32),                  # running max
            pltpu.VMEM((tile_q, 1), jnp.float32),                  # running sum
        ],
        compiler_params=pltpu.CompilerParams(
            dimension_semantics=("parallel", "arbitrary"),
            vmem_limit_bytes=vmem_limit),
        cost_estimate=cost_b,
    )(wh1_q, wh2t, adj_p, wh_kv)

    # TODO(synk): multi-head GAT would batch heads along the feature axis (also
    # filling the 256-wide v6e/v7x MXU); this module is single-head.
    return out_p[:n, :f_out]


def _xavier_uniform(key, shape, gain):
    fan_in, fan_out = shape[0], shape[1]
    bound = gain * jnp.sqrt(6.0 / (fan_in + fan_out))
    return jax.random.uniform(key, shape, jnp.float32, minval=-bound, maxval=bound)


def _reference(x, adj, weight, attention_coef, alpha):
    out_dim = weight.shape[1]
    hi = jax.lax.Precision.HIGHEST
    Wh = jnp.dot(x, weight, precision=hi)
    Wh1 = jnp.dot(Wh, attention_coef[:out_dim, :], precision=hi)
    Wh2 = jnp.dot(Wh, attention_coef[out_dim:, :], precision=hi)
    e = Wh1 + Wh2.T
    e = jnp.where(e > 0, e, alpha * e)
    att = jnp.where(adj > 0, e, jnp.full_like(e, -1.0e12))
    att = jax.nn.softmax(att, axis=1)
    h = jnp.dot(att, Wh, precision=hi)
    return jnp.where(h > 0, h, jnp.exp(h) - 1.0)


if __name__ == "__main__":
    # N=200 / F_in=48 / F_out=32 exercises node + feature padding and a multi-block
    # online softmax (padded grid is 2x2 with 128x128 tiles -> both v7x cores busy).
    N, IN_DIM, OUT_DIM = 200, 48, 32
    ALPHA = 0.2          # LeakyReLU negative slope
    GAIN = 1.387

    key = jax.random.PRNGKey(0)
    kx, kadj, kw, ka = jax.random.split(key, 4)

    x = jax.random.normal(kx, (N, IN_DIM), jnp.float32)
    adj = (jax.random.uniform(kadj, (N, N)) > 0.7).astype(jnp.float32)
    adj = adj.at[jnp.arange(N), jnp.arange(N)].set(1.0)  # self-loops: every row has a neighbor

    weight = _xavier_uniform(kw, (IN_DIM, OUT_DIM), GAIN)
    attention_coef = _xavier_uniform(ka, (2 * OUT_DIM, 1), GAIN)

    # O(N^2) adjacency preprocessing done once per graph (reusable across heads/layers).
    adj_i8 = preprocess_adjacency(adj)

    out = node_attention_layer(x, adj_i8, weight, attention_coef, alpha=ALPHA)
    out = jax.block_until_ready(out)

    ref = _reference(x, adj, weight, attention_coef, ALPHA)
    assert out.shape == (N, OUT_DIM)
    # bf16 p @ Wh on the MXU (+ approx reciprocal) -> tolerance loosened vs f32 ref.
    err = float(jnp.max(jnp.abs(out - ref)))
    assert jnp.allclose(out, ref, atol=5e-2, rtol=5e-2), err

    print("KERNEL_OK")
</pallas_src>

<mosaic_0001>
module attributes {stable_mosaic.version = 11 : i64} {
  func.func @_project_kernel(%arg0: i32, %arg1: memref<128x128xf32, #tpu.memory_space<vmem>>, %arg2: memref<128x128xf32, #tpu.memory_space<vmem>>, %arg3: memref<1x128xf32, #tpu.memory_space<vmem>>, %arg4: memref<1x128xf32, #tpu.memory_space<vmem>>, %arg5: memref<128x128xbf16, #tpu.memory_space<vmem>>, %arg6: memref<128x1xf32, #tpu.memory_space<vmem>>, %arg7: memref<128x1xf32, #tpu.memory_space<vmem>>) attributes {dimension_semantics = [#tpu.dimension_semantics<parallel>], iteration_bounds = array<i64: 2>, scalar_prefetch = 0 : i64, scratch_operands = 0 : i64, tpu.core_type = #tpu.core_type<tc>, window_params = [{transform_indices = @transform_0, window_bounds = array<i64: 128, 128>}, {pipeline_mode = #tpu.pipeline_mode<synchronous>, transform_indices = @transform_1, window_bounds = array<i64: 128, 128>}, {pipeline_mode = #tpu.pipeline_mode<synchronous>, transform_indices = @transform_2, window_bounds = array<i64: 1, 128>}, {pipeline_mode = #tpu.pipeline_mode<synchronous>, transform_indices = @transform_3, window_bounds = array<i64: 1, 128>}, {transform_indices = @transform_4, window_bounds = array<i64: 128, 128>}, {transform_indices = @transform_5, window_bounds = array<i64: 128, 1>}, {transform_indices = @transform_6, window_bounds = array<i64: 128, 1>}]} {
    %c0 = arith.constant 0 : index
    %c0_0 = arith.constant 0 : index
    %0 = vector.load %arg1[%c0, %c0_0] : memref<128x128xf32, #tpu.memory_space<vmem>>, vector<128x128xf32>
    %c0_1 = arith.constant 0 : index
    %c0_2 = arith.constant 0 : index
    %1 = vector.load %arg2[%c0_1, %c0_2] : memref<128x128xf32, #tpu.memory_space<vmem>>, vector<128x128xf32>
    %cst = arith.constant dense<0.000000e+00> : vector<128x128xf32>
    %2 = tpu.matmul %0, %1, %cst {dimension_numbers = #tpu.dot_dimension_numbers<[1], [0], [0], [1], [0, 0, 1, 1], [], []>} : vector<128x128xf32>, vector<128x128xf32>, vector<128x128xf32> -> vector<128x128xf32>
    %3 = arith.truncf %2 : vector<128x128xf32> to vector<128x128xbf16>
    %c0_3 = arith.constant 0 : index
    %c0_4 = arith.constant 0 : index
    %4 = vector.load %arg5[%c0_3, %c0_4] : memref<128x128xbf16, #tpu.memory_space<vmem>>, vector<128x128xbf16>
    tpu.vector_store %arg5[%c0_3, %c0_4], %3 {strides = array<i32>} : memref<128x128xbf16, #tpu.memory_space<vmem>>, vector<128x128xbf16>,
    %c0_5 = arith.constant 0 : index
    %c0_6 = arith.constant 0 : index
    %5 = vector.load %arg3[%c0_5, %c0_6] : memref<1x128xf32, #tpu.memory_space<vmem>>, vector<1x128xf32>
    %6 = vector.broadcast %5 : vector<1x128xf32> to vector<128x128xf32>
    %7 = arith.mulf %2, %6 : vector<128x128xf32>
    %cst_7 = arith.constant dense<0.000000e+00> : vector<128xf32>
    %8 = vector.multi_reduction <add>, %7, %cst_7 [1] : vector<128x128xf32> to vector<128xf32>
    %9 = vector.shape_cast %8 : vector<128xf32> to vector<128x1xf32>
    %c0_8 = arith.constant 0 : index
    %c0_9 = arith.constant 0 : index
    %10 = vector.load %arg6[%c0_8, %c0_9] : memref<128x1xf32, #tpu.memory_space<vmem>>, vector<128x1xf32>
    tpu.vector_store %arg6[%c0_8, %c0_9], %9 {strides = array<i32>} : memref<128x1xf32, #tpu.memory_space<vmem>>, vector<128x1xf32>,
    %c0_10 = arith.constant 0 : index
    %c0_11 = arith.constant 0 : index
    %11 = vector.load %arg4[%c0_10, %c0_11] : memref<1x128xf32, #tpu.memory_space<vmem>>, vector<1x128xf32>
    %12 = vector.broadcast %11 : vector<1x128xf32> to vector<128x128xf32>
    %13 = arith.mulf %2, %12 : vector<128x128xf32>
    %cst_12 = arith.constant dense<0.000000e+00> : vector<128xf32>
    %14 = vector.multi_reduction <add>, %13, %cst_12 [1] : vector<128x128xf32> to vector<128xf32>
    %15 = vector.shape_cast %14 : vector<128xf32> to vector<128x1xf32>
    %c0_13 = arith.constant 0 : index
    %c0_14 = arith.constant 0 : index
    %16 = vector.load %arg7[%c0_13, %c0_14] : memref<128x1xf32, #tpu.memory_space<vmem>>, vector<128x1xf32>
    tpu.vector_store %arg7[%c0_13, %c0_14], %15 {strides = array<i32>} : memref<128x1xf32, #tpu.memory_space<vmem>>, vector<128x1xf32>,
    return
  }
  func.func @transform_0(%arg0: i32) -> (i32, i32) {
    %c0_i32 = arith.constant 0 : i32
    %c0_i32_0 = arith.constant 0 : i32
    return %arg0, %c0_i32 : i32, i32
  }
  func.func @transform_1(%arg0: i32) -> (i32, i32) {
    %c0_i32 = arith.constant 0 : i32
    %c0_i32_0 = arith.constant 0 : i32
    %c0_i32_1 = arith.constant 0 : i32
    return %c0_i32, %c0_i32_0 : i32, i32
  }
  func.func @transform_2(%arg0: i32) -> (i32, i32) {
    %c0_i32 = arith.constant 0 : i32
    %c0_i32_0 = arith.constant 0 : i32
    %c0_i32_1 = arith.constant 0 : i32
    return %c0_i32, %c0_i32_0 : i32, i32
  }
  func.func @transform_3(%arg0: i32) -> (i32, i32) {
    %c0_i32 = arith.constant 0 : i32
    %c0_i32_0 = arith.constant 0 : i32
    %c0_i32_1 = arith.constant 0 : i32
    return %c0_i32, %c0_i32_0 : i32, i32
  }
  func.func @transform_4(%arg0: i32) -> (i32, i32) {
    %c0_i32 = arith.constant 0 : i32
    %c0_i32_0 = arith.constant 0 : i32
    return %arg0, %c0_i32 : i32, i32
  }
  func.func @transform_5(%arg0: i32) -> (i32, i32) {
    %c0_i32 = arith.constant 0 : i32
    %c0_i32_0 = arith.constant 0 : i32
    return %arg0, %c0_i32 : i32, i32
  }
  func.func @transform_6(%arg0: i32) -> (i32, i32) {
    %c0_i32 = arith.constant 0 : i32
    %c0_i32_0 = arith.constant 0 : i32
    return %arg0, %c0_i32 : i32, i32
  }
}

</mosaic_0001>

<llo_original>
// kernel: tpu_custom_call.1
$region0: #{tpu_custom_call.1}
  #allocation0 [shape = 'u32[]', space=smem, size = 0x4, offset = 0x4, fixed_abs, tag = 'smem constant byte address 0x4 - core index']
  #allocation1 [shape = 'u32[144,128]{1,0:T(1,128)}', space=vmem, size = 0x12000, scoped, tag = 'internal scratch']
  %s0 = inlined_call_operand.hbm [shape: f32[256,128], index: 0, kind: input, shape index: {}]
  %s1 = inlined_call_operand.hbm [shape: f32[128,128], index: 1, kind: input, shape index: {}]
  %s2 = inlined_call_operand.vmem [shape: f32[1,128], index: 2, kind: input, shape index: {}]
  %s3 = inlined_call_operand.vmem [shape: f32[1,128], index: 3, kind: input, shape index: {}]
  %s4 = inlined_call_operand.hbm [shape: bf16[256,128], index: 4, kind: output, shape index: {0}]
  %s5 = inlined_call_operand.vmem [shape: f32[256,1], index: 5, kind: output, shape index: {1}]
  %s6 = inlined_call_operand.vmem [shape: f32[256,1], index: 6, kind: output, shape index: {2}]
  %7 = xla_tuple %s4, %s5, %s6
  %s8 = sld [smem:[#allocation0]]
  $region73: #{tpu_custom_call.1} parent=0
    _
  %s10 = ssub.s32 1, %s8
  %s11 = scalar_select 0, %s10, %s8
  $region1: #{tpu_custom_call.1} parent=0
    #allocation2 [shape = 'u8[131072]{0}', space=vmem, size = 0x20000, scoped, tag = 'input window, operand 0']
    #allocation3 [shape = 's32[2]{0}', space=sflag, size = 0x8, scoped, tag = 'scoped memory for tpu_custom_call.1']
    #allocation4 [shape = 's32[2]{0}', space=sflag, size = 0x8, scoped, tag = 'scoped memory for tpu_custom_call.1']
    #allocation5 [shape = 'u8[65536]{0}', space=vmem, size = 0x10000, scoped, tag = 'input window, operand 1, single buffered']
    #allocation6 [shape = 's32[1]{0}', space=sflag, size = 0x4, scoped, tag = 'scoped memory for tpu_custom_call.1']
    #allocation7 [shape = 'u8[65536]{0}', space=vmem, size = 0x10000, scoped, tag = 'output window, operand 0']
    %12 = vsyncpa [#allocation3], 0
    %s13 = scalar_lea.sflag [#allocation3], 1
    %14 = vsyncpa %s13, 0
    %15 = vsyncpa [#allocation6], 0
    %16 = vsyncpa [#allocation4], 0
    %s17 = scalar_lea.sflag [#allocation4], 1
    %18 = vsyncpa %s17, 0
    loop: start=0, step=1, limit=4
    $region2: #{tpu_custom_call.1} parent=1 // loop_pre_header
      _
    $region3: #{tpu_custom_call.1} parent=1 // loop_header
      %s20 = sphi 0, %s24
      %p21 = scmp.ge.s32.totalorder %s20, 4
      %s30 = sphi 0, %s32
      %s33 = sphi 0, %s30
      %s34 = sphi 0, %s33
      %s50 = sphi 0, %s34
      %s54 = sphi 0, %s54
      %s56 = sphi 0, %s54
      %s57 = sphi 0, %s56
      %s71 = sphi 0, %s57
      %s75 = sphi 0, %s75
      %s77 = sphi 0, %s75
      %s78 = sphi 0, %s77
      %s92 = sphi 0, %s78
      %s96 = sphi 0, %s96
      %s98 = sphi 0, %s96
      %s99 = sphi 0, %s98
      %s113 = sphi 0, %s99
      %s119 = sphi 0, %s121
      %s122 = sphi 0, %s119
      %s123 = sphi 0, %s122
      %s139 = sphi 0, %s123
      %s145 = sphi 0, %s147
      %s148 = sphi 0, %s145
      %s149 = sphi 0, %s148
      %s165 = sphi 0, %s149
      %s171 = sphi 0, %s173
      %s174 = sphi 0, %s171
      %s175 = sphi 0, %s174
      %s191 = sphi 0, %s175
    $region4: #{tpu_custom_call.1} parent=1 // loop_header_branch
      %23 = sbr.rel (%p21) target = $region8
    $region5: #{tpu_custom_call.1} parent=1 // loop_body
      %s25 = ssub.s32 %s20, 1
      %s26 = ssub.s32 %s20, 2
      %s27 = sadd.s32 %s20, 1
      %s28 = ssub.s32 %s20, %s27
      %p29 = scmp.eq.s32.totalorder %s28, 0
      %s31 = sadd.s32 %s30, 1
      %s32 = scalar_select %p29, %s30, %s31
      %p35 = pneg %p29
      %p36 = scmp.eq.s32.totalorder %s20, 1
      %p37 = por %p35, %p36
      %p38 = scmp.ne.s32.totalorder %s30, %s33
      %p39 = scmp.eq.s32.totalorder %s20, 0
      %p40 = por %p38, %p39
      %p41 = scmp.ne.s32.totalorder %s30, %s33
      %p42 = scmp.eq.s32.totalorder %s25, 1
      %p43 = por %p41, %p42
      %p44 = scmp.ne.s32.totalorder %s33, %s34
      %p45 = scmp.eq.s32.totalorder %s25, 0
      %p46 = por %p44, %p45
      %p47 = scmp.ne.s32.totalorder %s33, %s34
      %p48 = scmp.eq.s32.totalorder %s26, 1
      %p49 = por %p47, %p48
      %p51 = scmp.ne.s32.totalorder %s34, %s50
      %p52 = scmp.eq.s32.totalorder %s26, 0
      %p53 = por %p51, %p52
      %s55 = sadd.s32 %s54, 1
      %p58 = scmp.eq.s32.totalorder %s20, 1
      %p59 = scmp.ne.s32.totalorder %s54, %s56
      %p60 = scmp.eq.s32.totalorder %s20, 0
      %p61 = por %p59, %p60
      %p62 = scmp.ne.s32.totalorder %s54, %s56
      %p63 = scmp.eq.s32.totalorder %s25, 1
      %p64 = por %p62, %p63
      %p65 = scmp.ne.s32.totalorder %s56, %s57
      %p66 = scmp.eq.s32.totalorder %s25, 0
      %p67 = por %p65, %p66
      %p68 = scmp.ne.s32.totalorder %s56, %s57
      %p69 = scmp.eq.s32.totalorder %s26, 1
      %p70 = por %p68, %p69
      %p72 = scmp.ne.s32.totalorder %s57, %s71
      %p73 = scmp.eq.s32.totalorder %s26, 0
      %p74 = por %p72, %p73
      %s76 = sadd.s32 %s75, 1
      %p79 = scmp.eq.s32.totalorder %s20, 1
      %p80 = scmp.ne.s32.totalorder %s75, %s77
      %p81 = scmp.eq.s32.totalorder %s20, 0
      %p82 = por %p80, %p81
      %p83 = scmp.ne.s32.totalorder %s75, %s77
      %p84 = scmp.eq.s32.totalorder %s25, 1
      %p85 = por %p83, %p84
      %p86 = scmp.ne.s32.totalorder %s77, %s78
      %p87 = scmp.eq.s32.totalorder %s25, 0
      %p88 = por %p86, %p87
      %p89 = scmp.ne.s32.totalorder %s77, %s78
      %p90 = scmp.eq.s32.totalorder %s26, 1
      %p91 = por %p89, %p90
      %p93 = scmp.ne.s32.totalorder %s78, %s92
      %p94 = scmp.eq.s32.totalorder %s26, 0
      %p95 = por %p93, %p94
      %s97 = sadd.s32 %s96, 1
      %p100 = scmp.eq.s32.totalorder %s20, 1
      %p101 = scmp.ne.s32.totalorder %s96, %s98
      %p102 = scmp.eq.s32.totalorder %s20, 0
      %p103 = por %p101, %p102
      %p104 = scmp.ne.s32.totalorder %s96, %s98
      %p105 = scmp.eq.s32.totalorder %s25, 1
      %p106 = por %p104, %p105
      %p107 = scmp.ne.s32.totalorder %s98, %s99
      %p108 = scmp.eq.s32.totalorder %s25, 0
      %p109 = por %p107, %p108
      %p110 = scmp.ne.s32.totalorder %s98, %s99
      %p111 = scmp.eq.s32.totalorder %s26, 1
      %p112 = por %p110, %p111
      %p114 = scmp.ne.s32.totalorder %s99, %s113
      %p115 = scmp.eq.s32.totalorder %s26, 0
      %p116 = por %p114, %p115
      %s117 = ssub.s32 %s20, %s27
      %p118 = scmp.eq.s32.totalorder %s117, 0
      %s120 = sadd.s32 %s119, 1
      %s121 = scalar_select %p118, %s119, %s120
      %p124 = pneg %p118
      %p125 = scmp.eq.s32.totalorder %s20, 1
      %p126 = por %p124, %p125
      %p127 = scmp.ne.s32.totalorder %s119, %s122
      %p128 = scmp.eq.s32.totalorder %s20, 0
      %p129 = por %p127, %p128
      %p130 = scmp.ne.s32.totalorder %s119, %s122
      %p131 = scmp.eq.s32.totalorder %s25, 1
      %p132 = por %p130, %p131
      %p133 = scmp.ne.s32.totalorder %s122, %s123
      %p134 = scmp.eq.s32.totalorder %s25, 0
      %p135 = por %p133, %p134
      %p136 = scmp.ne.s32.totalorder %s122, %s123
      %p137 = scmp.eq.s32.totalorder %s26, 1
      %p138 = por %p136, %p137
      %p140 = scmp.ne.s32.totalorder %s123, %s139
      %p141 = scmp.eq.s32.totalorder %s26, 0
      %p142 = por %p140, %p141
      %s143 = ssub.s32 %s20, %s27
      %p144 = scmp.eq.s32.totalorder %s143, 0
      %s146 = sadd.s32 %s145, 1
      %s147 = scalar_select %p144, %s145, %s146
      %p150 = pneg %p144
      %p151 = scmp.eq.s32.totalorder %s20, 1
      %p152 = por %p150, %p151
      %p153 = scmp.ne.s32.totalorder %s145, %s148
      %p154 = scmp.eq.s32.totalorder %s20, 0
      %p155 = por %p153, %p154
      %p156 = scmp.ne.s32.totalorder %s145, %s148
      %p157 = scmp.eq.s32.totalorder %s25, 1
      %p158 = por %p156, %p157
      %p159 = scmp.ne.s32.totalorder %s148, %s149
      %p160 = scmp.eq.s32.totalorder %s25, 0
      %p161 = por %p159, %p160
      %p162 = scmp.ne.s32.totalorder %s148, %s149
      %p163 = scmp.eq.s32.totalorder %s26, 1
      %p164 = por %p162, %p163
      %p166 = scmp.ne.s32.totalorder %s149, %s165
      %p167 = scmp.eq.s32.totalorder %s26, 0
      %p168 = por %p166, %p167
      %s169 = ssub.s32 %s20, %s27
      %p170 = scmp.eq.s32.totalorder %s169, 0
      %s172 = sadd.s32 %s171, 1
      %s173 = scalar_select %p170, %s171, %s172
      %p176 = pneg %p170
      %p177 = scmp.eq.s32.totalorder %s20, 1
      %p178 = por %p176, %p177
      %p179 = scmp.ne.s32.totalorder %s171, %s174
      %p180 = scmp.eq.s32.totalorder %s20, 0
      %p181 = por %p179, %p180
      %p182 = scmp.ne.s32.totalorder %s171, %s174
      %p183 = scmp.eq.s32.totalorder %s25, 1
      %p184 = por %p182, %p183
      %p185 = scmp.ne.s32.totalorder %s174, %s175
      %p186 = scmp.eq.s32.totalorder %s25, 0
      %p187 = por %p185, %p186
      %p188 = scmp.ne.s32.totalorder %s174, %s175
      %p189 = scmp.eq.s32.totalorder %s26, 1
      %p190 = por %p188, %p189
      %p192 = scmp.ne.s32.totalorder %s175, %s191
      %p193 = scmp.eq.s32.totalorder %s26, 0
      %p194 = por %p192, %p193
      %p195 = scmp.le.s32.totalorder 1, %s20
      %p196 = scmp.lt.s32.totalorder %s20, 3
      %p197 = pnand %p195, %p196
      %p198 = pneg %p197
      // Predicated region
      $region9: #{tpu_custom_call.1} parent=5 // pred_check
        _
      $region10: #{tpu_custom_call.1} parent=5 // pred_check_branch
        %200 = sbr.rel (%p197) target = $region12
      $region11: #{tpu_custom_call.1} parent=5 // pred_region
        %s201 = ssub.s32 %s20, 1
        // Predicated region
        $region13: #{tpu_custom_call.1} parent=11 // pred_check
          %p202 = pneg %p67
        $region14: #{tpu_custom_call.1} parent=11 // pred_check_branch
          %204 = sbr.rel (%p202) target = $region16
        $region15: #{tpu_custom_call.1} parent=11 // pred_region
          %s206 = ssub.s32 2048, 2048
          %207 = vsyncadd [#allocation6], %s206
          %s208 = sshll.u32 [#allocation5], 4
          %s209 = int_to_ptr.vmem [resolvable:$true] %s208
          %214 = dma.hbm_to_vmem [thread:$0]  %s1, 2048, %s209, [#allocation6], 128, 128, 8
        $region16: #{tpu_custom_call.1} parent=11 // pred_fallthru
          _
        // Predicated region
        $region17: #{tpu_custom_call.1} parent=11 // pred_check
          %p215 = pneg %p88
        $region18: #{tpu_custom_call.1} parent=11 // pred_check_branch
          %217 = sbr.rel (%p215) target = $region20
        $region19: #{tpu_custom_call.1} parent=11 // pred_region
          _
        $region20: #{tpu_custom_call.1} parent=11 // pred_fallthru
          _
        // Predicated region
        $region21: #{tpu_custom_call.1} parent=11 // pred_check
          %p218 = pneg %p109
        $region22: #{tpu_custom_call.1} parent=11 // pred_check_branch
          %220 = sbr.rel (%p218) target = $region24
        $region23: #{tpu_custom_call.1} parent=11 // pred_region
          _
        $region24: #{tpu_custom_call.1} parent=11 // pred_fallthru
          _
      $region12: #{tpu_custom_call.1} parent=5 // pred_fallthru
        _
      %p221 = scmp.lt.s32.totalorder %s20, 2
      // Predicated region
      $region25: #{tpu_custom_call.1} parent=5 // pred_check
        %p222 = pneg %p221
      $region26: #{tpu_custom_call.1} parent=5 // pred_check_branch
        %224 = sbr.rel (%p222) target = $region28
      $region27: #{tpu_custom_call.1} parent=5 // pred_region
        // Predicated region
        $region29: #{tpu_custom_call.1} parent=27 // pred_check
          %p225 = pneg %p40
        $region30: #{tpu_custom_call.1} parent=27 // pred_check_branch
          %227 = sbr.rel (%p225) target = $region32
        $region31: #{tpu_custom_call.1} parent=27 // pred_region
          %s228 = sand.u32 %s30, 1
          %s229 = scalar_lea.sflag [#allocation3], %s228
          %s230 = sand.u32 %s30, 1
          %s231 = smul.addr %s230, 128
          %s232 = scalar_lea.vmem [#allocation2], %s231
          %s233 = smul.u32 16, %s20
          %s235 = ssub.s32 2048, 2048
          %236 = vsyncadd %s229, %s235
          %s237 = smul.addr %s233, 128
          %s238 = scalar_lea.hbm %s0, %s237
          %s239 = sshll.u32 %s232, 4
          %s240 = int_to_ptr.vmem [resolvable:$true] %s239
          %245 = dma.hbm_to_vmem [thread:$0]  %s238, 2048, %s240, %s229, 128, 128, 8
        $region32: #{tpu_custom_call.1} parent=27 // pred_fallthru
          _
      $region28: #{tpu_custom_call.1} parent=5 // pred_fallthru
        _
      %p246 = scmp.le.s32.totalorder 1, %s20
      %p247 = scmp.lt.s32.totalorder %s20, 3
      %p248 = pnand %p246, %p247
      %p249 = pneg %p248
      // Predicated region
      $region33: #{tpu_custom_call.1} parent=5 // pred_check
        _
      $region34: #{tpu_custom_call.1} parent=5 // pred_check_branch
        %251 = sbr.rel (%p248) target = $region36
      $region35: #{tpu_custom_call.1} parent=5 // pred_region
        %s252 = ssub.s32 %s20, 1
        %s253 = sand.u32 %s33, 1
        %s254 = scalar_lea.sflag [#allocation3], %s253
        %s255 = sand.u32 %s33, 1
        %s256 = smul.addr %s255, 128
        %s257 = scalar_lea.vmem [#allocation2], %s256
        // Predicated region
        $region37: #{tpu_custom_call.1} parent=35 // pred_check
          %p258 = pneg %p46
        $region38: #{tpu_custom_call.1} parent=35 // pred_check_branch
          %260 = sbr.rel (%p258) target = $region40
        $region39: #{tpu_custom_call.1} parent=35 // pred_region
          %261 = dma.done %s254, 2048
        $region40: #{tpu_custom_call.1} parent=35 // pred_fallthru
          _
        // Predicated region
        $region41: #{tpu_custom_call.1} parent=35 // pred_check
          %p262 = pneg %p67
        $region42: #{tpu_custom_call.1} parent=35 // pred_check_branch
          %264 = sbr.rel (%p262) target = $region44
        $region43: #{tpu_custom_call.1} parent=35 // pred_region
          %265 = dma.done [#allocation6], 2048
        $region44: #{tpu_custom_call.1} parent=35 // pred_fallthru
          _
        %s266 = sand.u32 %s33, 1
        %s267 = scalar_lea.sflag [#allocation3], %s266
        %s268 = sand.u32 %s33, 1
        %s269 = smul.addr %s268, 128
        %s270 = scalar_lea.vmem [#allocation2], %s269
        %p271 = pneg %p46
        %p272 = pneg %p43
        %p273 = pneg %p67
        %p274 = pneg %p64
        %p275 = pneg %p88
        %p276 = pneg %p85
        %p277 = pneg %p109
        %p278 = pneg %p106
        %p279 = pneg %p135
        %p280 = pneg %p132
        %s281 = sand.u32 %s122, 1
        %s282 = scalar_lea.sflag [#allocation4], %s281
        %s283 = sand.u32 %s122, 1
        %s284 = smul.addr %s283, 64
        %s285 = scalar_lea.vmem [#allocation7], %s284
        %p286 = pneg %p161
        %p287 = pneg %p158
        %s288 = smul.u32 16, %s25
        %p289 = scmp.lt.s32.totalorder %s288, 31
        %s290 = scalar_select %p289, %s288, 31
        %s291 = smul.addr %s290, 8
        %s292 = scalar_lea.vmem %s5, %s291
        %p293 = pneg %p187
        %p294 = pneg %p184
        %s295 = smul.u32 16, %s25
        %p296 = scmp.lt.s32.totalorder %s295, 31
        %s297 = scalar_select %p296, %s295, 31
        %s298 = smul.addr %s297, 8
        %s299 = scalar_lea.vmem %s6, %s298
        %s300 = smul.u32 16, %s25
        %s301 = smul.u32 16, %s25
        %s302 = smul.u32 16, %s25
        %p303 = scmp.lt.s32.totalorder %s302, 31
        %s304 = scalar_select %p303, %s302, 31
        %s305 = smul.addr %s304, 8
        %s306 = scalar_lea.vmem %s5, %s305
        %s307 = smul.u32 16, %s25
        %s308 = smul.u32 16, %s25
        %p309 = scmp.lt.s32.totalorder %s308, 31
        %s310 = scalar_select %p309, %s308, 31
        %s311 = smul.addr %s310, 8
        %s312 = scalar_lea.vmem %s6, %s311
        %s313 = smul.u32 16, %s25
        %v314 = vld [vmem:[%s257] sm:$0xff]
        %v315 = vld [vmem:[%s257 + $0x8] sm:$0xff]
        %v316 = vld [vmem:[%s257 + $0x10] sm:$0xff]
        %v317 = vld [vmem:[%s257 + $0x18] sm:$0xff]
        %v318 = vld [vmem:[%s257 + $0x20] sm:$0xff]
        %v319 = vld [vmem:[%s257 + $0x28] sm:$0xff]
        %v320 = vld [vmem:[%s257 + $0x30] sm:$0xff]
        %v321 = vld [vmem:[%s257 + $0x38] sm:$0xff]
        %v322 = vld [vmem:[%s257 + $0x40] sm:$0xff]
        %v323 = vld [vmem:[%s257 + $0x48] sm:$0xff]
        %v324 = vld [vmem:[%s257 + $0x50] sm:$0xff]
        %v325 = vld [vmem:[%s257 + $0x58] sm:$0xff]
        %v326 = vld [vmem:[%s257 + $0x60] sm:$0xff]
        %v327 = vld [vmem:[%s257 + $0x68] sm:$0xff]
        %v328 = vld [vmem:[%s257 + $0x70] sm:$0xff]
        %v329 = vld [vmem:[%s257 + $0x78] sm:$0xff]
        %v330 = vld [vmem:[#allocation5] sm:$0xff]
        %v331 = vld [vmem:[#allocation5 + $0x8] sm:$0xff]
        %v332 = vld [vmem:[#allocation5 + $0x10] sm:$0xff]
        %v333 = vld [vmem:[#allocation5 + $0x18] sm:$0xff]
        %v334 = vld [vmem:[#allocation5 + $0x20] sm:$0xff]
        %v335 = vld [vmem:[#allocation5 + $0x28] sm:$0xff]
        %v336 = vld [vmem:[#allocation5 + $0x30] sm:$0xff]
        %v337 = vld [vmem:[#allocation5 + $0x38] sm:$0xff]
        %v338 = vld [vmem:[#allocation5 + $0x40] sm:$0xff]
        %v339 = vld [vmem:[#allocation5 + $0x48] sm:$0xff]
        %v340 = vld [vmem:[#allocation5 + $0x50] sm:$0xff]
        %v341 = vld [vmem:[#allocation5 + $0x58] sm:$0xff]
        %v342 = vld [vmem:[#allocation5 + $0x60] sm:$0xff]
        %v343 = vld [vmem:[#allocation5 + $0x68] sm:$0xff]
        %v344 = vld [vmem:[#allocation5 + $0x70] sm:$0xff]
        %v345 = vld [vmem:[#allocation5 + $0x78] sm:$0xff]
        %346 = vmatprep.subr.mxu0 0.0
        %347 = vmatpush1.msra.mxu0 %v345
        %348 = vmatprep.subr.mxu0 0.0
        %349 = vmatpush1.msra.mxu0 %v344
        %350 = vmatprep.subr.mxu0 0.0
        %351 = vmatpush1.msra.mxu0 %v343
        %352 = vmatprep.subr.mxu0 0.0
        %353 = vmatpush1.msra.mxu0 %v342
        %354 = vmatprep.subr.mxu0 0.0
        %355 = vmatpush1.msra.mxu0 %v341
        %356 = vmatprep.subr.mxu0 0.0
        %357 = vmatpush1.msra.mxu0 %v340
        %358 = vmatprep.subr.mxu0 0.0
        %359 = vmatpush1.msra.mxu0 %v339
        %360 = vmatprep.subr.mxu0 0.0
        %361 = vmatpush1.msra.mxu0 %v338
        %362 = vmatprep.subr.mxu0 0.0
        %363 = vmatpush1.msra.mxu0 %v337
        %364 = vmatprep.subr.mxu0 0.0
        %365 = vmatpush1.msra.mxu0 %v336
        %366 = vmatprep.subr.mxu0 0.0
        %367 = vmatpush1.msra.mxu0 %v335
        %368 = vmatprep.subr.mxu0 0.0
        %369 = vmatpush1.msra.mxu0 %v334
        %370 = vmatprep.subr.mxu0 0.0
        %371 = vmatpush1.msra.mxu0 %v333
        %372 = vmatprep.subr.mxu0 0.0
        %373 = vmatpush1.msra.mxu0 %v332
        %374 = vmatprep.subr.mxu0 0.0
        %375 = vmatpush1.msra.mxu0 %v331
        %376 = vmatprep.subr.mxu0 0.0
        %377 = vmatpush1.msra.mxu0 %v330
        %378 = vmatprep.subr.mxu0 0.0
        %379 = vmatpush2.msra.mxu0 0.0
        %380 = vmatprep.subr.mxu0 0.0
        %381 = vmatpush2.msra.mxu0 0.0
        %382 = vmatprep.subr.mxu0 0.0
        %383 = vmatpush2.msra.mxu0 0.0
        %384 = vmatprep.subr.mxu0 0.0
        %385 = vmatpush2.msra.mxu0 0.0
        %386 = vmatprep.subr.mxu0 0.0
        %387 = vmatpush2.msra.mxu0 0.0
        %388 = vmatprep.subr.mxu0 0.0
        %389 = vmatpush2.msra.mxu0 0.0
        %390 = vmatprep.subr.mxu0 0.0
        %391 = vmatpush2.msra.mxu0 0.0
        %392 = vmatprep.subr.mxu0 0.0
        %393 = vmatpush2.msra.mxu0 0.0
        %394 = vmatprep.subr.mxu0 0.0
        %395 = vmatpush2.msra.mxu0 0.0
        %396 = vmatprep.subr.mxu0 0.0
        %397 = vmatpush2.msra.mxu0 0.0
        %398 = vmatprep.subr.mxu0 0.0
        %399 = vmatpush2.msra.mxu0 0.0
        %400 = vmatprep.subr.mxu0 0.0
        %401 = vmatpush2.msra.mxu0 0.0
        %402 = vmatprep.subr.mxu0 0.0
        %403 = vmatpush2.msra.mxu0 0.0
        %404 = vmatprep.subr.mxu0 0.0
        %405 = vmatpush2.msra.mxu0 0.0
        %406 = vmatprep.subr.mxu0 0.0
        %407 = vmatpush2.msra.mxu0 0.0
        %408 = vmatprep.subr.mxu0 0.0
        %409 = vmatpush2.msra.mxu0 0.0
        %410 = vmatprep.mubr.f32.mxu0 0.0
        %411 = vmatmul.mubr.f32.gmra.mxu0 %v314
        %v412 = vpop.f32.mrf.mxu0
        %v413 = vadd.f32 0.0, %v412
        %v414 = vpop.f32.mrf.mxu0
        %415 = vmatprep.mubr.f32.mxu0 0.0
        %416 = vmatmul.mubr.f32.gmra.mxu0 %v315
        %v417 = vpop.f32.mrf.mxu0
        %v418 = vadd.f32 0.0, %v417
        %v419 = vpop.f32.mrf.mxu0
        %420 = vmatprep.mubr.f32.mxu0 0.0
        %421 = vmatmul.mubr.f32.gmra.mxu0 %v316
        %v422 = vpop.f32.mrf.mxu0
        %v423 = vadd.f32 0.0, %v422
        %v424 = vpop.f32.mrf.mxu0
        %425 = vmatprep.mubr.f32.mxu0 0.0
        %426 = vmatmul.mubr.f32.gmra.mxu0 %v317
        %v427 = vpop.f32.mrf.mxu0
        %v428 = vadd.f32 0.0, %v427
        %v429 = vpop.f32.mrf.mxu0
        %430 = vmatprep.mubr.f32.mxu0 0.0
        %431 = vmatmul.mubr.f32.gmra.mxu0 %v318
        %v432 = vpop.f32.mrf.mxu0
        %v433 = vadd.f32 0.0, %v432
        %v434 = vpop.f32.mrf.mxu0
        %435 = vmatprep.mubr.f32.mxu0 0.0
        %436 = vmatmul.mubr.f32.gmra.mxu0 %v319
        %v437 = vpop.f32.mrf.mxu0
        %v438 = vadd.f32 0.0, %v437
        %v439 = vpop.f32.mrf.mxu0
        %440 = vmatprep.mubr.f32.mxu0 0.0
        %441 = vmatmul.mubr.f32.gmra.mxu0 %v320
        %v442 = vpop.f32.mrf.mxu0
        %v443 = vadd.f32 0.0, %v442
        %v444 = vpop.f32.mrf.mxu0
        %445 = vmatprep.mubr.f32.mxu0 0.0
        %446 = vmatmul.mubr.f32.gmra.mxu0 %v321
        %v447 = vpop.f32.mrf.mxu0
        %v448 = vadd.f32 0.0, %v447
        %v449 = vpop.f32.mrf.mxu0
        %450 = vmatprep.mubr.f32.mxu0 0.0
        %451 = vmatmul.mubr.f32.gmra.mxu0 %v322
        %v452 = vpop.f32.mrf.mxu0
        %v453 = vadd.f32 0.0, %v452
        %v454 = vpop.f32.mrf.mxu0
        %455 = vmatprep.mubr.f32.mxu0 0.0
        %456 = vmatmul.mubr.f32.gmra.mxu0 %v323
        %v457 = vpop.f32.mrf.mxu0
        %v458 = vadd.f32 0.0, %v457
        %v459 = vpop.f32.mrf.mxu0
        %460 = vmatprep.mubr.f32.mxu0 0.0
        %461 = vmatmul.mubr.f32.gmra.mxu0 %v324
        %v462 = vpop.f32.mrf.mxu0
        %v463 = vadd.f32 0.0, %v462
        %v464 = vpop.f32.mrf.mxu0
        %465 = vmatprep.mubr.f32.mxu0 0.0
        %466 = vmatmul.mubr.f32.gmra.mxu0 %v325
        %v467 = vpop.f32.mrf.mxu0
        %v468 = vadd.f32 0.0, %v467
        %v469 = vpop.f32.mrf.mxu0
        %470 = vmatprep.mubr.f32.mxu0 0.0
        %471 = vmatmul.mubr.f32.gmra.mxu0 %v326
        %v472 = vpop.f32.mrf.mxu0
        %v473 = vadd.f32 0.0, %v472
        %v474 = vpop.f32.mrf.mxu0
        %475 = vmatprep.mubr.f32.mxu0 0.0
        %476 = vmatmul.mubr.f32.gmra.mxu0 %v327
        %v477 = vpop.f32.mrf.mxu0
        %v478 = vadd.f32 0.0, %v477
        %v479 = vpop.f32.mrf.mxu0
        %480 = vmatprep.mubr.f32.mxu0 0.0
        %481 = vmatmul.mubr.f32.gmra.mxu0 %v328
        %v482 = vpop.f32.mrf.mxu0
        %v483 = vadd.f32 0.0, %v482
        %v484 = vpop.f32.mrf.mxu0
        %485 = vmatprep.mubr.f32.mxu0 0.0
        %486 = vmatmul.mubr.f32.gmra.mxu0 %v329
        %v487 = vpop.f32.mrf.mxu0
        %v488 = vadd.f32 0.0, %v487
        %v489 = vpop.f32.mrf.mxu0
        %490 = vdwg.mxu0
        %v491 = vpack.c.bf16 %v418, %v413
        %v492 = vpack.c.bf16 %v428, %v423
        %v493 = vpack.c.bf16 %v438, %v433
        %v494 = vpack.c.bf16 %v448, %v443
        %v495 = vpack.c.bf16 %v458, %v453
        %v496 = vpack.c.bf16 %v468, %v463
        %v497 = vpack.c.bf16 %v478, %v473
        %v498 = vpack.c.bf16 %v488, %v483
        %v507 = vunpack.c.l.b16 %v491
        %v508 = vunpack.c.h.b16 %v491
        %v509 = vunpack.c.l.b16 %v492
        %v510 = vunpack.c.h.b16 %v492
        %v511 = vunpack.c.l.b16 %v493
        %v512 = vunpack.c.h.b16 %v493
        %v513 = vunpack.c.l.b16 %v494
        %v514 = vunpack.c.h.b16 %v494
        %v515 = vunpack.c.l.b16 %v495
        %v516 = vunpack.c.h.b16 %v495
        %v517 = vunpack.c.l.b16 %v496
        %v518 = vunpack.c.h.b16 %v496
        %v519 = vunpack.c.l.b16 %v497
        %v520 = vunpack.c.h.b16 %v497
        %v521 = vunpack.c.l.b16 %v498
        %v522 = vunpack.c.h.b16 %v498
        %v523 = vpack.c.b16 %v507, %v507
        %v524 = vpack.c.b16 %v508, %v508
        %v525 = vpack.c.b16 %v509, %v509
        %v526 = vpack.c.b16 %v510, %v510
        %v527 = vpack.c.b16 %v511, %v511
        %v528 = vpack.c.b16 %v512, %v512
        %v529 = vpack.c.b16 %v513, %v513
        %v530 = vpack.c.b16 %v514, %v514
        %v531 = vpack.c.b16 %v515, %v515
        %v532 = vpack.c.b16 %v516, %v516
        %v533 = vpack.c.b16 %v517, %v517
        %v534 = vpack.c.b16 %v518, %v518
        %v535 = vpack.c.b16 %v519, %v519
        %v536 = vpack.c.b16 %v520, %v520
        %v537 = vpack.c.b16 %v521, %v521
        %v538 = vpack.c.b16 %v522, %v522
        %555 = vst [vmem:[%s285] sm:$0xf] %v523
        %556 = vst [vmem:[%s285 + $0x4] sm:$0xf] %v524
        %557 = vst [vmem:[%s285 + $0x8] sm:$0xf] %v525
        %558 = vst [vmem:[%s285 + $0xc] sm:$0xf] %v526
        %559 = vst [vmem:[%s285 + $0x10] sm:$0xf] %v527
        %560 = vst [vmem:[%s285 + $0x14] sm:$0xf] %v528
        %561 = vst [vmem:[%s285 + $0x18] sm:$0xf] %v529
        %562 = vst [vmem:[%s285 + $0x1c] sm:$0xf] %v530
        %563 = vst [vmem:[%s285 + $0x20] sm:$0xf] %v531
        %564 = vst [vmem:[%s285 + $0x24] sm:$0xf] %v532
        %565 = vst [vmem:[%s285 + $0x28] sm:$0xf] %v533
        %566 = vst [vmem:[%s285 + $0x2c] sm:$0xf] %v534
        %567 = vst [vmem:[%s285 + $0x30] sm:$0xf] %v535
        %568 = vst [vmem:[%s285 + $0x34] sm:$0xf] %v536
        %569 = vst [vmem:[%s285 + $0x38] sm:$0xf] %v537
        %570 = vst [vmem:[%s285 + $0x3c] sm:$0xf] %v538
        %v571 = vld [vmem:[%s2] sm:$0x1]
        %v573 = vlaneseq
        %v574 = vshrl.u32 %v573, 7
        %v575 = vsub.s32 0, %v574
        %v576 = vrot.slane %v571, %v575
        %v578 = vmul.f32 %v413, %v576
        %v579 = vmul.f32 %v418, %v576
        %v580 = vmul.f32 %v423, %v576
        %v581 = vmul.f32 %v428, %v576
        %v582 = vmul.f32 %v433, %v576
        %v583 = vmul.f32 %v438, %v576
        %v584 = vmul.f32 %v443, %v576
        %v585 = vmul.f32 %v448, %v576
        %v586 = vmul.f32 %v453, %v576
        %v587 = vmul.f32 %v458, %v576
        %v588 = vmul.f32 %v463, %v576
        %v589 = vmul.f32 %v468, %v576
        %v590 = vmul.f32 %v473, %v576
        %v591 = vmul.f32 %v478, %v576
        %v592 = vmul.f32 %v483, %v576
        %v593 = vmul.f32 %v488, %v576
        %594 = vadd.xlane.f32.xlu0 %v578
        %v595 = vpop.xlane.xlu0 %594
        %596 = vadd.xlane.f32.xlu0 %v579
        %v597 = vpop.xlane.xlu0 %596
        %598 = vadd.xlane.f32.xlu0 %v580
        %v599 = vpop.xlane.xlu0 %598
        %600 = vadd.xlane.f32.xlu0 %v581
        %v601 = vpop.xlane.xlu0 %600
        %602 = vadd.xlane.f32.xlu0 %v582
        %v603 = vpop.xlane.xlu0 %602
        %604 = vadd.xlane.f32.xlu0 %v583
        %v605 = vpop.xlane.xlu0 %604
        %606 = vadd.xlane.f32.xlu0 %v584
        %v607 = vpop.xlane.xlu0 %606
        %608 = vadd.xlane.f32.xlu0 %v585
        %v609 = vpop.xlane.xlu0 %608
        %610 = vadd.xlane.f32.xlu0 %v586
        %v611 = vpop.xlane.xlu0 %610
        %612 = vadd.xlane.f32.xlu0 %v587
        %v613 = vpop.xlane.xlu0 %612
        %614 = vadd.xlane.f32.xlu0 %v588
        %v615 = vpop.xlane.xlu0 %614
        %616 = vadd.xlane.f32.xlu0 %v589
        %v617 = vpop.xlane.xlu0 %616
        %618 = vadd.xlane.f32.xlu0 %v590
        %v619 = vpop.xlane.xlu0 %618
        %620 = vadd.xlane.f32.xlu0 %v591
        %v621 = vpop.xlane.xlu0 %620
        %622 = vadd.xlane.f32.xlu0 %v592
        %v623 = vpop.xlane.xlu0 %622
        %624 = vadd.xlane.f32.xlu0 %v593
        %v625 = vpop.xlane.xlu0 %624
        %vm626 = vcmask 7168
        %627 = vst.msk [vmem:[%s306] sm:$0xff] %vm626, %v595
        %628 = vst.msk [vmem:[%s306 + $0x8] sm:$0xff] %vm626, %v597
        %629 = vst.msk [vmem:[%s306 + $0x10] sm:$0xff] %vm626, %v599
        %630 = vst.msk [vmem:[%s306 + $0x18] sm:$0xff] %vm626, %v601
        %631 = vst.msk [vmem:[%s306 + $0x20] sm:$0xff] %vm626, %v603
        %632 = vst.msk [vmem:[%s306 + $0x28] sm:$0xff] %vm626, %v605
        %633 = vst.msk [vmem:[%s306 + $0x30] sm:$0xff] %vm626, %v607
        %634 = vst.msk [vmem:[%s306 + $0x38] sm:$0xff] %vm626, %v609
        %635 = vst.msk [vmem:[%s306 + $0x40] sm:$0xff] %vm626, %v611
        %636 = vst.msk [vmem:[%s306 + $0x48] sm:$0xff] %vm626, %v613
        %637 = vst.msk [vmem:[%s306 + $0x50] sm:$0xff] %vm626, %v615
        %638 = vst.msk [vmem:[%s306 + $0x58] sm:$0xff] %vm626, %v617
        %639 = vst.msk [vmem:[%s306 + $0x60] sm:$0xff] %vm626, %v619
        %640 = vst.msk [vmem:[%s306 + $0x68] sm:$0xff] %vm626, %v621
        %641 = vst.msk [vmem:[%s306 + $0x70] sm:$0xff] %vm626, %v623
        %642 = vst.msk [vmem:[%s306 + $0x78] sm:$0xff] %vm626, %v625
        %v643 = vld [vmem:[%s3] sm:$0x1]
        %v645 = vlaneseq
        %v646 = vshrl.u32 %v645, 7
        %v647 = vsub.s32 0, %v646
        %v648 = vrot.slane %v643, %v647
        %v650 = vmul.f32 %v413, %v648
        %v651 = vmul.f32 %v418, %v648
        %v652 = vmul.f32 %v423, %v648
        %v653 = vmul.f32 %v428, %v648
        %v654 = vmul.f32 %v433, %v648
        %v655 = vmul.f32 %v438, %v648
        %v656 = vmul.f32 %v443, %v648
        %v657 = vmul.f32 %v448, %v648
        %v658 = vmul.f32 %v453, %v648
        %v659 = vmul.f32 %v458, %v648
        %v660 = vmul.f32 %v463, %v648
        %v661 = vmul.f32 %v468, %v648
        %v662 = vmul.f32 %v473, %v648
        %v663 = vmul.f32 %v478, %v648
        %v664 = vmul.f32 %v483, %v648
        %v665 = vmul.f32 %v488, %v648
        %666 = vadd.xlane.f32.xlu0 %v650
        %v667 = vpop.xlane.xlu0 %666
        %668 = vadd.xlane.f32.xlu0 %v651
        %v669 = vpop.xlane.xlu0 %668
        %670 = vadd.xlane.f32.xlu0 %v652
        %v671 = vpop.xlane.xlu0 %670
        %672 = vadd.xlane.f32.xlu0 %v653
        %v673 = vpop.xlane.xlu0 %672
        %674 = vadd.xlane.f32.xlu0 %v654
        %v675 = vpop.xlane.xlu0 %674
        %676 = vadd.xlane.f32.xlu0 %v655
        %v677 = vpop.xlane.xlu0 %676
        %678 = vadd.xlane.f32.xlu0 %v656
        %v679 = vpop.xlane.xlu0 %678
        %680 = vadd.xlane.f32.xlu0 %v657
        %v681 = vpop.xlane.xlu0 %680
        %682 = vadd.xlane.f32.xlu0 %v658
        %v683 = vpop.xlane.xlu0 %682
        %684 = vadd.xlane.f32.xlu0 %v659
        %v685 = vpop.xlane.xlu0 %684
        %686 = vadd.xlane.f32.xlu0 %v660
        %v687 = vpop.xlane.xlu0 %686
        %688 = vadd.xlane.f32.xlu0 %v661
        %v689 = vpop.xlane.xlu0 %688
        %690 = vadd.xlane.f32.xlu0 %v662
        %v691 = vpop.xlane.xlu0 %690
        %692 = vadd.xlane.f32.xlu0 %v663
        %v693 = vpop.xlane.xlu0 %692
        %694 = vadd.xlane.f32.xlu0 %v664
        %v695 = vpop.xlane.xlu0 %694
        %696 = vadd.xlane.f32.xlu0 %v665
        %v697 = vpop.xlane.xlu0 %696
        %698 = vst.msk [vmem:[%s312] sm:$0xff] %vm626, %v667
        %699 = vst.msk [vmem:[%s312 + $0x8] sm:$0xff] %vm626, %v669
        %700 = vst.msk [vmem:[%s312 + $0x10] sm:$0xff] %vm626, %v671
        %701 = vst.msk [vmem:[%s312 + $0x18] sm:$0xff] %vm626, %v673
        %702 = vst.msk [vmem:[%s312 + $0x20] sm:$0xff] %vm626, %v675
        %703 = vst.msk [vmem:[%s312 + $0x28] sm:$0xff] %vm626, %v677
        %704 = vst.msk [vmem:[%s312 + $0x30] sm:$0xff] %vm626, %v679
        %705 = vst.msk [vmem:[%s312 + $0x38] sm:$0xff] %vm626, %v681
        %706 = vst.msk [vmem:[%s312 + $0x40] sm:$0xff] %vm626, %v683
        %707 = vst.msk [vmem:[%s312 + $0x48] sm:$0xff] %vm626, %v685
        %708 = vst.msk [vmem:[%s312 + $0x50] sm:$0xff] %vm626, %v687
        %709 = vst.msk [vmem:[%s312 + $0x58] sm:$0xff] %vm626, %v689
        %710 = vst.msk [vmem:[%s312 + $0x60] sm:$0xff] %vm626, %v691
        %711 = vst.msk [vmem:[%s312 + $0x68] sm:$0xff] %vm626, %v693
        %712 = vst.msk [vmem:[%s312 + $0x70] sm:$0xff] %vm626, %v695
        %713 = vst.msk [vmem:[%s312 + $0x78] sm:$0xff] %vm626, %v697
        %s714 = sand.u32 %s122, 1
        %s715 = scalar_lea.sflag [#allocation4], %s714
        %s716 = sand.u32 %s122, 1
        %s717 = smul.addr %s716, 64
        %s718 = scalar_lea.vmem [#allocation7], %s717
        %s719 = smul.u32 16, %s25
        %p720 = scmp.lt.s32.totalorder %s719, 31
        %s721 = scalar_select %p720, %s719, 31
        %s722 = smul.addr %s721, 8
        %s723 = scalar_lea.vmem %s5, %s722
        %s724 = smul.u32 16, %s25
        %p725 = scmp.lt.s32.totalorder %s724, 31
        %s726 = scalar_select %p725, %s724, 31
        %s727 = smul.addr %s726, 8
        %s728 = scalar_lea.vmem %s6, %s727
        // Predicated region
        $region45: #{tpu_custom_call.1} parent=35 // pred_check
          %p729 = pneg %p132
        $region46: #{tpu_custom_call.1} parent=35 // pred_check_branch
          %731 = sbr.rel (%p729) target = $region48
        $region47: #{tpu_custom_call.1} parent=35 // pred_region
          %s732 = smul.u32 16, %s25
          %s734 = ssub.s32 1024, 1024
          %735 = vsyncadd %s715, %s734
          %s736 = smul.addr %s732, 64
          %s737 = scalar_lea.hbm %s4, %s736
          %s738 = sshll.u32 %s718, 4
          %s739 = int_to_ptr.vmem [resolvable:$true] %s738
          %744 = dma.vmem_to_hbm [thread:$0]  %s739, 1024, %s737, %s715, 64, 64, 4
        $region48: #{tpu_custom_call.1} parent=35 // pred_fallthru
          _
        // Predicated region
        $region49: #{tpu_custom_call.1} parent=35 // pred_check
          %p745 = pneg %p158
        $region50: #{tpu_custom_call.1} parent=35 // pred_check_branch
          %747 = sbr.rel (%p745) target = $region52
        $region51: #{tpu_custom_call.1} parent=35 // pred_region
          %s748 = smul.u32 16, %s25
        $region52: #{tpu_custom_call.1} parent=35 // pred_fallthru
          _
        // Predicated region
        $region53: #{tpu_custom_call.1} parent=35 // pred_check
          %p749 = pneg %p184
        $region54: #{tpu_custom_call.1} parent=35 // pred_check_branch
          %751 = sbr.rel (%p749) target = $region56
        $region55: #{tpu_custom_call.1} parent=35 // pred_region
          %s752 = smul.u32 16, %s25
        $region56: #{tpu_custom_call.1} parent=35 // pred_fallthru
          _
      $region36: #{tpu_custom_call.1} parent=5 // pred_fallthru
        _
      %p753 = scmp.le.s32.totalorder 2, %s20
      // Predicated region
      $region57: #{tpu_custom_call.1} parent=5 // pred_check
        %p754 = pneg %p753
      $region58: #{tpu_custom_call.1} parent=5 // pred_check_branch
        %756 = sbr.rel (%p754) target = $region60
      $region59: #{tpu_custom_call.1} parent=5 // pred_region
        %s757 = ssub.s32 %s20, 2
        // Predicated region
        $region61: #{tpu_custom_call.1} parent=59 // pred_check
          %p758 = pneg %p138
        $region62: #{tpu_custom_call.1} parent=59 // pred_check_branch
          %760 = sbr.rel (%p758) target = $region64
        $region63: #{tpu_custom_call.1} parent=59 // pred_region
          %s761 = sand.u32 %s123, 1
          %s762 = scalar_lea.sflag [#allocation4], %s761
          %s763 = sand.u32 %s123, 1
          %s764 = smul.addr %s763, 64
          %s765 = scalar_lea.vmem [#allocation7], %s764
          %766 = dma.done %s762, 1024
        $region64: #{tpu_custom_call.1} parent=59 // pred_fallthru
          _
        // Predicated region
        $region65: #{tpu_custom_call.1} parent=59 // pred_check
          %p767 = pneg %p164
        $region66: #{tpu_custom_call.1} parent=59 // pred_check_branch
          %769 = sbr.rel (%p767) target = $region68
        $region67: #{tpu_custom_call.1} parent=59 // pred_region
          %s770 = smul.u32 16, %s26
          %p771 = scmp.lt.s32.totalorder %s770, 31
          %s772 = scalar_select %p771, %s770, 31
          %s773 = smul.addr %s772, 8
          %s774 = scalar_lea.vmem %s5, %s773
        $region68: #{tpu_custom_call.1} parent=59 // pred_fallthru
          _
        // Predicated region
        $region69: #{tpu_custom_call.1} parent=59 // pred_check
          %p775 = pneg %p190
        $region70: #{tpu_custom_call.1} parent=59 // pred_check_branch
          %777 = sbr.rel (%p775) target = $region72
        $region71: #{tpu_custom_call.1} parent=59 // pred_region
          %s778 = smul.u32 16, %s26
          %p779 = scmp.lt.s32.totalorder %s778, 31
          %s780 = scalar_select %p779, %s778, 31
          %s781 = smul.addr %s780, 8
          %s782 = scalar_lea.vmem %s6, %s781
        $region72: #{tpu_custom_call.1} parent=59 // pred_fallthru
          _
      $region60: #{tpu_custom_call.1} parent=5 // pred_fallthru
        _
    $region6: #{tpu_custom_call.1} parent=1 // loop_footer
      %s24 = sadd.s32 1, %s20
    $region7: #{tpu_custom_call.1} parent=1 // loop_footer_branch
      %19 = sbr.rel target = $region3
    $region8: #{tpu_custom_call.1} parent=1 // loop_exit
      _
    %783 = vsyncpa [#allocation3], 1
    %s784 = scalar_lea.sflag [#allocation3], 1
    %785 = vsyncpa %s784, 1
    %786 = vsyncpa [#allocation6], 1
    %787 = vsyncpa [#allocation4], 1
    %s788 = scalar_lea.sflag [#allocation4], 1
    %789 = vsyncpa %s788, 1

</llo_original>
